<compile_context>
chip_gen: v5e
topology: v5e:2x2
jax: 0.10.0
libtpu: 0.0.40
codegen_flags: <defaults>
</compile_context>

<pallas_src>
import numpy as np
import jax
import jax.numpy as jnp
from jax.experimental import pallas as pl
from jax.experimental.pallas import tpu as pltpu


# ---------------------------------------------------------------------------
# Fused Pallas kernel: strided conv (VPU tap-sum) + bilinear upsample (MXU)
# ---------------------------------------------------------------------------
def _make_fused_kernel(weights, C, NN):
    """weights: (C, N*N) nested tuple of Python floats (frozen module parameters)."""

    def kernel(taps_ref, ah_ref, awt_ref, out_ref, small_ref):
        # taps_ref : (1, N*N, Hs, Ws)   resident across the row-tile axis
        # ah_ref   : (THo, Hs)          row-tile slice of the H interpolation matrix
        # awt_ref  : (Ws, Wo)           resident W interpolation matrix (transposed)
        # out_ref  : (1, C, THo, Wo)
        # small_ref: VMEM scratch (C, Hs, Ws)

        # --- stride-N conv: computed once per batch (row-tile index == 0) ----
        @pl.when(pl.program_id(1) == 0)
        def _():
            for c in range(C):
                acc = weights[c][0] * taps_ref[0, 0]
                for t in range(1, NN):
                    acc = acc + weights[c][t] * taps_ref[0, t]
                small_ref[c] = acc

        # --- bilinear upsample of this row-tile: A_h_tile @ small_c @ A_w^T --
        for c in range(C):
            tmp = jnp.dot(ah_ref[...], small_ref[c],
                          preferred_element_type=jnp.float32)        # (THo, Ws)
            out_ref[0, c] = jnp.dot(tmp, awt_ref[...],
                                    preferred_element_type=jnp.float32)  # (THo, Wo)

    return kernel


# ---------------------------------------------------------------------------
# Glue helpers (plain JAX / numpy)
# ---------------------------------------------------------------------------
def _bilinear_matrix(out_size, in_size):
    """Row-interpolation matrix matching F.interpolate(mode='bilinear',
    align_corners=False) along one axis."""
    scale = in_size / out_size
    dst = jnp.arange(out_size, dtype=jnp.float32)
    src = scale * (dst + 0.5) - 0.5
    src = jnp.maximum(src, 0.0)                       # PyTorch clamps negative coords
    i0 = jnp.clip(jnp.floor(src).astype(jnp.int32), 0, in_size - 1)
    i1 = jnp.minimum(i0 + 1, in_size - 1)
    frac = src - i0.astype(jnp.float32)
    rows = jnp.arange(out_size)
    A = jnp.zeros((out_size, in_size), jnp.float32)
    A = A.at[rows, i0].add(1.0 - frac)
    A = A.at[rows, i1].add(frac)
    return A


def _pick_row_tile(total, target=256):
    """Largest 8-aligned divisor of `total` that is <= target (or `total` itself)."""
    if total <= target:
        return total
    for t in range(target, 7, -1):
        if total % t == 0 and t % 8 == 0:
            return t
    return total


class FastPallas:
    """Pallas TPU port of demosaic/fast.py::Fast."""

    def __init__(self, msfa):
        msfa = np.asarray(jax.device_get(msfa), dtype=np.float32)
        C, N, N2 = msfa.shape
        assert N == N2, "Received non-square MSFA."
        k = msfa / msfa.sum(axis=(1, 2), keepdims=True)   # (C, N, N), each sums to 1
        self.kernel = jnp.asarray(k)                       # for the pure-JAX reference
        # Frozen parameters -> bake as scalar immediates inside the kernel (cheapest path).
        self._weights = tuple(tuple(float(v) for v in row) for row in k.reshape(C, N * N))
        self.kernel_size = N
        self.num_channels = C

    def __call__(self, raw):
        B, one, H, W = raw.shape
        assert one == 1
        N, C = self.kernel_size, self.num_channels
        NN = N * N
        Hs = (H - N) // N + 1
        Ws = (W - N) // N + 1
        Ho, Wo = Hs * N, Ws * N        # == F.interpolate(scale_factor=N) output size

        # ---- glue: rearrange raw into per-tap small-resolution planes (one pass) ----
        r = raw[:, 0, :Ho, :Wo].astype(jnp.float32)
        taps = (r.reshape(B, Hs, N, Ws, N)
                 .transpose(0, 2, 4, 1, 3)
                 .reshape(B, NN, Hs, Ws))                  # taps[b, i*N+j, hs, ws]

        # ---- bilinear interpolation matrices (align_corners=False) ----
        A_h = _bilinear_matrix(Ho, Hs)                     # (Ho, Hs)
        A_wT = _bilinear_matrix(Wo, Ws).T                  # (Ws, Wo)

        THo = _pick_row_tile(Ho, 256)
        n_t = Ho // THo

        kernel_fn = _make_fused_kernel(self._weights, C, NN)
        out = pl.pallas_call(
            kernel_fn,
            out_shape=jax.ShapeDtypeStruct((B, C, Ho, Wo), jnp.float32),
            grid_spec=pltpu.PrefetchScalarGridSpec(
                num_scalar_prefetch=0,
                grid=(B, n_t),
                in_specs=[
                    # taps: full small-res planes per batch, resident across row tiles
                    pl.BlockSpec((1, NN, Hs, Ws), lambda b, t: (b, 0, 0, 0)),
                    # A_h: row-tile slice
                    pl.BlockSpec((THo, Hs), lambda b, t: (t, 0)),
                    # A_w^T: constant / resident
                    pl.BlockSpec((Ws, Wo), lambda b, t: (0, 0)),
                ],
                out_specs=pl.BlockSpec((1, C, THo, Wo), lambda b, t: (b, 0, t, 0)),
                scratch_shapes=[pltpu.VMEM((C, Hs, Ws), jnp.float32)],
            ),
            compiler_params=pltpu.CompilerParams(
                dimension_semantics=("parallel", "arbitrary")),
        )(taps, A_h, A_wT)
        return out


# ---------------------------------------------------------------------------
# Pure-JAX reference for the correctness check
# ---------------------------------------------------------------------------
def _reference(raw, kernel_cnn, N):
    w = kernel_cnn[:, None, :, :]                          # (C, 1, N, N)
    small = jax.lax.conv_general_dilated(
        raw.astype(jnp.float32), w, window_strides=(N, N), padding="VALID",
        dimension_numbers=("NCHW", "OIHW", "NCHW"),
    )
    Hs, Ws = small.shape[2], small.shape[3]
    A_h = _bilinear_matrix(Hs * N, Hs)
    A_wT = _bilinear_matrix(Ws * N, Ws).T
    return jnp.einsum("yh,bchw,wx->bcyx", A_h, small, A_wT)


if __name__ == "__main__":
    key = jax.random.PRNGKey(0)
    k_msfa, k_raw = jax.random.split(key)

    B, C, N, H, W = 2, 4, 2, 16, 16
    # Deterministic synthetic MSFA (positive so per-channel sums are nonzero).
    msfa = jax.random.uniform(k_msfa, (C, N, N), jnp.float32, 0.1, 1.0)
    raw = jax.random.uniform(k_raw, (B, 1, H, W), jnp.float32)

    model = FastPallas(msfa)
    out = jax.block_until_ready(model(raw))
    assert out.shape == (B, C, H, W), out.shape

    ref = jax.block_until_ready(_reference(raw, model.kernel, N))
    assert jnp.allclose(out, ref, atol=1e-4, rtol=1e-4), (
        float(jnp.max(jnp.abs(out - ref)))
    )

    print("KERNEL_OK")
</pallas_src>

<mosaic_0001>
module attributes {stable_mosaic.version = 11 : i64} {
  func.func @kernel(%arg0: i32, %arg1: i32, %arg2: memref<1x4x8x8xf32, #tpu.memory_space<vmem>>, %arg3: memref<16x8xf32, #tpu.memory_space<vmem>>, %arg4: memref<8x16xf32, #tpu.memory_space<vmem>>, %arg5: memref<1x4x16x16xf32, #tpu.memory_space<vmem>>, %arg6: memref<4x8x8xf32, #tpu.memory_space<vmem>>) attributes {dimension_semantics = [#tpu.dimension_semantics<parallel>, #tpu.dimension_semantics<arbitrary>], iteration_bounds = array<i64: 2, 1>, scalar_prefetch = 0 : i64, scratch_operands = 1 : i64, tpu.core_type = #tpu.core_type<tc>, window_params = [{transform_indices = @transform_0, window_bounds = array<i64: 1, 4, 8, 8>}, {transform_indices = @transform_1, window_bounds = array<i64: 16, 8>}, {pipeline_mode = #tpu.pipeline_mode<synchronous>, transform_indices = @transform_2, window_bounds = array<i64: 8, 16>}, {transform_indices = @transform_3, window_bounds = array<i64: 1, 4, 16, 16>}]} {
    %c0_i32 = arith.constant 0 : i32
    %0 = arith.cmpi eq, %arg1, %c0_i32 : i32
    %1 = arith.extui %0 : i1 to i32
    %c0_i32_0 = arith.constant 0 : i32
    %2 = arith.cmpi ne, %1, %c0_i32_0 : i32
    scf.if %2 {
      %c0_48 = arith.constant 0 : index
      %c0_49 = arith.constant 0 : index
      %c0_50 = arith.constant 0 : index
      %c0_51 = arith.constant 0 : index
      %39 = vector.load %arg2[%c0_48, %c0_49, %c0_50, %c0_51] : memref<1x4x8x8xf32, #tpu.memory_space<vmem>>, vector<1x1x8x8xf32>
      %40 = vector.shape_cast %39 : vector<1x1x8x8xf32> to vector<8x8xf32>
      %cst_52 = arith.constant 0.524713099 : f32
      %41 = vector.broadcast %cst_52 : f32 to vector<8x8xf32>
      %42 = arith.mulf %41, %40 : vector<8x8xf32>
      %c0_53 = arith.constant 0 : index
      %c1_54 = arith.constant 1 : index
      %c0_55 = arith.constant 0 : index
      %c0_56 = arith.constant 0 : index
      %43 = vector.load %arg2[%c0_53, %c1_54, %c0_55, %c0_56] : memref<1x4x8x8xf32, #tpu.memory_space<vmem>>, vector<1x1x8x8xf32>
      %44 = vector.shape_cast %43 : vector<1x1x8x8xf32> to vector<8x8xf32>
      %cst_57 = arith.constant 0.16152072 : f32
      %45 = vector.broadcast %cst_57 : f32 to vector<8x8xf32>
      %46 = arith.mulf %45, %44 : vector<8x8xf32>
      %47 = arith.addf %42, %46 : vector<8x8xf32>
      %c0_58 = arith.constant 0 : index
      %c2_59 = arith.constant 2 : index
      %c0_60 = arith.constant 0 : index
      %c0_61 = arith.constant 0 : index
      %48 = vector.load %arg2[%c0_58, %c2_59, %c0_60, %c0_61] : memref<1x4x8x8xf32, #tpu.memory_space<vmem>>, vector<1x1x8x8xf32>
      %49 = vector.shape_cast %48 : vector<1x1x8x8xf32> to vector<8x8xf32>
      %cst_62 = arith.constant 0.186175883 : f32
      %50 = vector.broadcast %cst_62 : f32 to vector<8x8xf32>
      %51 = arith.mulf %50, %49 : vector<8x8xf32>
      %52 = arith.addf %47, %51 : vector<8x8xf32>
      %c0_63 = arith.constant 0 : index
      %c3_64 = arith.constant 3 : index
      %c0_65 = arith.constant 0 : index
      %c0_66 = arith.constant 0 : index
      %53 = vector.load %arg2[%c0_63, %c3_64, %c0_65, %c0_66] : memref<1x4x8x8xf32, #tpu.memory_space<vmem>>, vector<1x1x8x8xf32>
      %54 = vector.shape_cast %53 : vector<1x1x8x8xf32> to vector<8x8xf32>
      %cst_67 = arith.constant 0.127590269 : f32
      %55 = vector.broadcast %cst_67 : f32 to vector<8x8xf32>
      %56 = arith.mulf %55, %54 : vector<8x8xf32>
      %57 = arith.addf %52, %56 : vector<8x8xf32>
      %c0_68 = arith.constant 0 : index
      %c0_69 = arith.constant 0 : index
      %c0_70 = arith.constant 0 : index
      %58 = vector.load %arg6[%c0_68, %c0_69, %c0_70] : memref<4x8x8xf32, #tpu.memory_space<vmem>>, vector<1x8x8xf32>
      %59 = vector.shape_cast %58 : vector<1x8x8xf32> to vector<8x8xf32>
      %60 = vector.shape_cast %57 : vector<8x8xf32> to vector<1x8x8xf32>
      tpu.vector_store %arg6[%c0_68, %c0_69, %c0_70], %60 {strides = array<i32>} : memref<4x8x8xf32, #tpu.memory_space<vmem>>, vector<1x8x8xf32>,
      %c0_71 = arith.constant 0 : index
      %c0_72 = arith.constant 0 : index
      %c0_73 = arith.constant 0 : index
      %c0_74 = arith.constant 0 : index
      %61 = vector.load %arg2[%c0_71, %c0_72, %c0_73, %c0_74] : memref<1x4x8x8xf32, #tpu.memory_space<vmem>>, vector<1x1x8x8xf32>
      %62 = vector.shape_cast %61 : vector<1x1x8x8xf32> to vector<8x8xf32>
      %cst_75 = arith.constant 0.133080021 : f32
      %63 = vector.broadcast %cst_75 : f32 to vector<8x8xf32>
      %64 = arith.mulf %63, %62 : vector<8x8xf32>
      %c0_76 = arith.constant 0 : index
      %c1_77 = arith.constant 1 : index
      %c0_78 = arith.constant 0 : index
      %c0_79 = arith.constant 0 : index
      %65 = vector.load %arg2[%c0_76, %c1_77, %c0_78, %c0_79] : memref<1x4x8x8xf32, #tpu.memory_space<vmem>>, vector<1x1x8x8xf32>
      %66 = vector.shape_cast %65 : vector<1x1x8x8xf32> to vector<8x8xf32>
      %cst_80 = arith.constant 0.366006732 : f32
      %67 = vector.broadcast %cst_80 : f32 to vector<8x8xf32>
      %68 = arith.mulf %67, %66 : vector<8x8xf32>
      %69 = arith.addf %64, %68 : vector<8x8xf32>
      %c0_81 = arith.constant 0 : index
      %c2_82 = arith.constant 2 : index
      %c0_83 = arith.constant 0 : index
      %c0_84 = arith.constant 0 : index
      %70 = vector.load %arg2[%c0_81, %c2_82, %c0_83, %c0_84] : memref<1x4x8x8xf32, #tpu.memory_space<vmem>>, vector<1x1x8x8xf32>
      %71 = vector.shape_cast %70 : vector<1x1x8x8xf32> to vector<8x8xf32>
      %cst_85 = arith.constant 0.385086536 : f32
      %72 = vector.broadcast %cst_85 : f32 to vector<8x8xf32>
      %73 = arith.mulf %72, %71 : vector<8x8xf32>
      %74 = arith.addf %69, %73 : vector<8x8xf32>
      %c0_86 = arith.constant 0 : index
      %c3_87 = arith.constant 3 : index
      %c0_88 = arith.constant 0 : index
      %c0_89 = arith.constant 0 : index
      %75 = vector.load %arg2[%c0_86, %c3_87, %c0_88, %c0_89] : memref<1x4x8x8xf32, #tpu.memory_space<vmem>>, vector<1x1x8x8xf32>
      %76 = vector.shape_cast %75 : vector<1x1x8x8xf32> to vector<8x8xf32>
      %cst_90 = arith.constant 0.115826696 : f32
      %77 = vector.broadcast %cst_90 : f32 to vector<8x8xf32>
      %78 = arith.mulf %77, %76 : vector<8x8xf32>
      %79 = arith.addf %74, %78 : vector<8x8xf32>
      %c1_91 = arith.constant 1 : index
      %c0_92 = arith.constant 0 : index
      %c0_93 = arith.constant 0 : index
      %80 = vector.load %arg6[%c1_91, %c0_92, %c0_93] : memref<4x8x8xf32, #tpu.memory_space<vmem>>, vector<1x8x8xf32>
      %81 = vector.shape_cast %80 : vector<1x8x8xf32> to vector<8x8xf32>
      %82 = vector.shape_cast %79 : vector<8x8xf32> to vector<1x8x8xf32>
      tpu.vector_store %arg6[%c1_91, %c0_92, %c0_93], %82 {strides = array<i32>} : memref<4x8x8xf32, #tpu.memory_space<vmem>>, vector<1x8x8xf32>,
      %c0_94 = arith.constant 0 : index
      %c0_95 = arith.constant 0 : index
      %c0_96 = arith.constant 0 : index
      %c0_97 = arith.constant 0 : index
      %83 = vector.load %arg2[%c0_94, %c0_95, %c0_96, %c0_97] : memref<1x4x8x8xf32, #tpu.memory_space<vmem>>, vector<1x1x8x8xf32>
      %84 = vector.shape_cast %83 : vector<1x1x8x8xf32> to vector<8x8xf32>
      %cst_98 = arith.constant 0.511630356 : f32
      %85 = vector.broadcast %cst_98 : f32 to vector<8x8xf32>
      %86 = arith.mulf %85, %84 : vector<8x8xf32>
      %c0_99 = arith.constant 0 : index
      %c1_100 = arith.constant 1 : index
      %c0_101 = arith.constant 0 : index
      %c0_102 = arith.constant 0 : index
      %87 = vector.load %arg2[%c0_99, %c1_100, %c0_101, %c0_102] : memref<1x4x8x8xf32, #tpu.memory_space<vmem>>, vector<1x1x8x8xf32>
      %88 = vector.shape_cast %87 : vector<1x1x8x8xf32> to vector<8x8xf32>
      %cst_103 = arith.constant 0.0675976351 : f32
      %89 = vector.broadcast %cst_103 : f32 to vector<8x8xf32>
      %90 = arith.mulf %89, %88 : vector<8x8xf32>
      %91 = arith.addf %86, %90 : vector<8x8xf32>
      %c0_104 = arith.constant 0 : index
      %c2_105 = arith.constant 2 : index
      %c0_106 = arith.constant 0 : index
      %c0_107 = arith.constant 0 : index
      %92 = vector.load %arg2[%c0_104, %c2_105, %c0_106, %c0_107] : memref<1x4x8x8xf32, #tpu.memory_space<vmem>>, vector<1x1x8x8xf32>
      %93 = vector.shape_cast %92 : vector<1x1x8x8xf32> to vector<8x8xf32>
      %cst_108 = arith.constant 0.10100618 : f32
      %94 = vector.broadcast %cst_108 : f32 to vector<8x8xf32>
      %95 = arith.mulf %94, %93 : vector<8x8xf32>
      %96 = arith.addf %91, %95 : vector<8x8xf32>
      %c0_109 = arith.constant 0 : index
      %c3_110 = arith.constant 3 : index
      %c0_111 = arith.constant 0 : index
      %c0_112 = arith.constant 0 : index
      %97 = vector.load %arg2[%c0_109, %c3_110, %c0_111, %c0_112] : memref<1x4x8x8xf32, #tpu.memory_space<vmem>>, vector<1x1x8x8xf32>
      %98 = vector.shape_cast %97 : vector<1x1x8x8xf32> to vector<8x8xf32>
      %cst_113 = arith.constant 0.319765866 : f32
      %99 = vector.broadcast %cst_113 : f32 to vector<8x8xf32>
      %100 = arith.mulf %99, %98 : vector<8x8xf32>
      %101 = arith.addf %96, %100 : vector<8x8xf32>
      %c2_114 = arith.constant 2 : index
      %c0_115 = arith.constant 0 : index
      %c0_116 = arith.constant 0 : index
      %102 = vector.load %arg6[%c2_114, %c0_115, %c0_116] : memref<4x8x8xf32, #tpu.memory_space<vmem>>, vector<1x8x8xf32>
      %103 = vector.shape_cast %102 : vector<1x8x8xf32> to vector<8x8xf32>
      %104 = vector.shape_cast %101 : vector<8x8xf32> to vector<1x8x8xf32>
      tpu.vector_store %arg6[%c2_114, %c0_115, %c0_116], %104 {strides = array<i32>} : memref<4x8x8xf32, #tpu.memory_space<vmem>>, vector<1x8x8xf32>,
      %c0_117 = arith.constant 0 : index
      %c0_118 = arith.constant 0 : index
      %c0_119 = arith.constant 0 : index
      %c0_120 = arith.constant 0 : index
      %105 = vector.load %arg2[%c0_117, %c0_118, %c0_119, %c0_120] : memref<1x4x8x8xf32, #tpu.memory_space<vmem>>, vector<1x1x8x8xf32>
      %106 = vector.shape_cast %105 : vector<1x1x8x8xf32> to vector<8x8xf32>
      %cst_121 = arith.constant 0.0836448445 : f32
      %107 = vector.broadcast %cst_121 : f32 to vector<8x8xf32>
      %108 = arith.mulf %107, %106 : vector<8x8xf32>
      %c0_122 = arith.constant 0 : index
      %c1_123 = arith.constant 1 : index
      %c0_124 = arith.constant 0 : index
      %c0_125 = arith.constant 0 : index
      %109 = vector.load %arg2[%c0_122, %c1_123, %c0_124, %c0_125] : memref<1x4x8x8xf32, #tpu.memory_space<vmem>>, vector<1x1x8x8xf32>
      %110 = vector.shape_cast %109 : vector<1x1x8x8xf32> to vector<8x8xf32>
      %cst_126 = arith.constant 0.25057891 : f32
      %111 = vector.broadcast %cst_126 : f32 to vector<8x8xf32>
      %112 = arith.mulf %111, %110 : vector<8x8xf32>
      %113 = arith.addf %108, %112 : vector<8x8xf32>
      %c0_127 = arith.constant 0 : index
      %c2_128 = arith.constant 2 : index
      %c0_129 = arith.constant 0 : index
      %c0_130 = arith.constant 0 : index
      %114 = vector.load %arg2[%c0_127, %c2_128, %c0_129, %c0_130] : memref<1x4x8x8xf32, #tpu.memory_space<vmem>>, vector<1x1x8x8xf32>
      %115 = vector.shape_cast %114 : vector<1x1x8x8xf32> to vector<8x8xf32>
      %cst_131 = arith.constant 0.380162179 : f32
      %116 = vector.broadcast %cst_131 : f32 to vector<8x8xf32>
      %117 = arith.mulf %116, %115 : vector<8x8xf32>
      %118 = arith.addf %113, %117 : vector<8x8xf32>
      %c0_132 = arith.constant 0 : index
      %c3_133 = arith.constant 3 : index
      %c0_134 = arith.constant 0 : index
      %c0_135 = arith.constant 0 : index
      %119 = vector.load %arg2[%c0_132, %c3_133, %c0_134, %c0_135] : memref<1x4x8x8xf32, #tpu.memory_space<vmem>>, vector<1x1x8x8xf32>
      %120 = vector.shape_cast %119 : vector<1x1x8x8xf32> to vector<8x8xf32>
      %cst_136 = arith.constant 0.285614103 : f32
      %121 = vector.broadcast %cst_136 : f32 to vector<8x8xf32>
      %122 = arith.mulf %121, %120 : vector<8x8xf32>
      %123 = arith.addf %118, %122 : vector<8x8xf32>
      %c3_137 = arith.constant 3 : index
      %c0_138 = arith.constant 0 : index
      %c0_139 = arith.constant 0 : index
      %124 = vector.load %arg6[%c3_137, %c0_138, %c0_139] : memref<4x8x8xf32, #tpu.memory_space<vmem>>, vector<1x8x8xf32>
      %125 = vector.shape_cast %124 : vector<1x8x8xf32> to vector<8x8xf32>
      %126 = vector.shape_cast %123 : vector<8x8xf32> to vector<1x8x8xf32>
      tpu.vector_store %arg6[%c3_137, %c0_138, %c0_139], %126 {strides = array<i32>} : memref<4x8x8xf32, #tpu.memory_space<vmem>>, vector<1x8x8xf32>,
    } else {
    }
    %c0 = arith.constant 0 : index
    %c0_1 = arith.constant 0 : index
    %3 = vector.load %arg3[%c0, %c0_1] : memref<16x8xf32, #tpu.memory_space<vmem>>, vector<16x8xf32>
    %c0_2 = arith.constant 0 : index
    %c0_3 = arith.constant 0 : index
    %c0_4 = arith.constant 0 : index
    %4 = vector.load %arg6[%c0_2, %c0_3, %c0_4] : memref<4x8x8xf32, #tpu.memory_space<vmem>>, vector<1x8x8xf32>
    %5 = vector.shape_cast %4 : vector<1x8x8xf32> to vector<8x8xf32>
    %cst = arith.constant dense<0.000000e+00> : vector<16x8xf32>
    %6 = tpu.matmul %3, %5, %cst {dimension_numbers = #tpu.dot_dimension_numbers<[1], [0], [0], [1], [0, 0, 1, 1], [], []>} : vector<16x8xf32>, vector<8x8xf32>, vector<16x8xf32> -> vector<16x8xf32>
    %c0_5 = arith.constant 0 : index
    %c0_6 = arith.constant 0 : index
    %7 = vector.load %arg4[%c0_5, %c0_6] : memref<8x16xf32, #tpu.memory_space<vmem>>, vector<8x16xf32>
    %cst_7 = arith.constant dense<0.000000e+00> : vector<16x16xf32>
    %8 = tpu.matmul %6, %7, %cst_7 {dimension_numbers = #tpu.dot_dimension_numbers<[1], [0], [0], [1], [0, 0, 1, 1], [], []>} : vector<16x8xf32>, vector<8x16xf32>, vector<16x16xf32> -> vector<16x16xf32>
    %c0_8 = arith.constant 0 : index
    %c0_9 = arith.constant 0 : index
    %c0_10 = arith.constant 0 : index
    %c0_11 = arith.constant 0 : index
    %9 = vector.load %arg5[%c0_8, %c0_9, %c0_10, %c0_11] : memref<1x4x16x16xf32, #tpu.memory_space<vmem>>, vector<1x1x16x16xf32>
    %10 = vector.shape_cast %9 : vector<1x1x16x16xf32> to vector<16x16xf32>
    %11 = vector.shape_cast %8 : vector<16x16xf32> to vector<1x1x16x16xf32>
    tpu.vector_store %arg5[%c0_8, %c0_9, %c0_10, %c0_11], %11 {strides = array<i32>} : memref<1x4x16x16xf32, #tpu.memory_space<vmem>>, vector<1x1x16x16xf32>,
    %c0_12 = arith.constant 0 : index
    %c0_13 = arith.constant 0 : index
    %12 = vector.load %arg3[%c0_12, %c0_13] : memref<16x8xf32, #tpu.memory_space<vmem>>, vector<16x8xf32>
    %c1 = arith.constant 1 : index
    %c0_14 = arith.constant 0 : index
    %c0_15 = arith.constant 0 : index
    %13 = vector.load %arg6[%c1, %c0_14, %c0_15] : memref<4x8x8xf32, #tpu.memory_space<vmem>>, vector<1x8x8xf32>
    %14 = vector.shape_cast %13 : vector<1x8x8xf32> to vector<8x8xf32>
    %cst_16 = arith.constant dense<0.000000e+00> : vector<16x8xf32>
    %15 = tpu.matmul %12, %14, %cst_16 {dimension_numbers = #tpu.dot_dimension_numbers<[1], [0], [0], [1], [0, 0, 1, 1], [], []>} : vector<16x8xf32>, vector<8x8xf32>, vector<16x8xf32> -> vector<16x8xf32>
    %c0_17 = arith.constant 0 : index
    %c0_18 = arith.constant 0 : index
    %16 = vector.load %arg4[%c0_17, %c0_18] : memref<8x16xf32, #tpu.memory_space<vmem>>, vector<8x16xf32>
    %cst_19 = arith.constant dense<0.000000e+00> : vector<16x16xf32>
    %17 = tpu.matmul %15, %16, %cst_19 {dimension_numbers = #tpu.dot_dimension_numbers<[1], [0], [0], [1], [0, 0, 1, 1], [], []>} : vector<16x8xf32>, vector<8x16xf32>, vector<16x16xf32> -> vector<16x16xf32>
    %c0_20 = arith.constant 0 : index
    %c1_21 = arith.constant 1 : index
    %c0_22 = arith.constant 0 : index
    %c0_23 = arith.constant 0 : index
    %18 = vector.load %arg5[%c0_20, %c1_21, %c0_22, %c0_23] : memref<1x4x16x16xf32, #tpu.memory_space<vmem>>, vector<1x1x16x16xf32>
    %19 = vector.shape_cast %18 : vector<1x1x16x16xf32> to vector<16x16xf32>
    %20 = vector.shape_cast %17 : vector<16x16xf32> to vector<1x1x16x16xf32>
    tpu.vector_store %arg5[%c0_20, %c1_21, %c0_22, %c0_23], %20 {strides = array<i32>} : memref<1x4x16x16xf32, #tpu.memory_space<vmem>>, vector<1x1x16x16xf32>,
    %c0_24 = arith.constant 0 : index
    %c0_25 = arith.constant 0 : index
    %21 = vector.load %arg3[%c0_24, %c0_25] : memref<16x8xf32, #tpu.memory_space<vmem>>, vector<16x8xf32>
    %c2 = arith.constant 2 : index
    %c0_26 = arith.constant 0 : index
    %c0_27 = arith.constant 0 : index
    %22 = vector.load %arg6[%c2, %c0_26, %c0_27] : memref<4x8x8xf32, #tpu.memory_space<vmem>>, vector<1x8x8xf32>
    %23 = vector.shape_cast %22 : vector<1x8x8xf32> to vector<8x8xf32>
    %cst_28 = arith.constant dense<0.000000e+00> : vector<16x8xf32>
    %24 = tpu.matmul %21, %23, %cst_28 {dimension_numbers = #tpu.dot_dimension_numbers<[1], [0], [0], [1], [0, 0, 1, 1], [], []>} : vector<16x8xf32>, vector<8x8xf32>, vector<16x8xf32> -> vector<16x8xf32>
    %c0_29 = arith.constant 0 : index
    %c0_30 = arith.constant 0 : index
    %25 = vector.load %arg4[%c0_29, %c0_30] : memref<8x16xf32, #tpu.memory_space<vmem>>, vector<8x16xf32>
    %cst_31 = arith.constant dense<0.000000e+00> : vector<16x16xf32>
    %26 = tpu.matmul %24, %25, %cst_31 {dimension_numbers = #tpu.dot_dimension_numbers<[1], [0], [0], [1], [0, 0, 1, 1], [], []>} : vector<16x8xf32>, vector<8x16xf32>, vector<16x16xf32> -> vector<16x16xf32>
    %c0_32 = arith.constant 0 : index
    %c2_33 = arith.constant 2 : index
    %c0_34 = arith.constant 0 : index
    %c0_35 = arith.constant 0 : index
    %27 = vector.load %arg5[%c0_32, %c2_33, %c0_34, %c0_35] : memref<1x4x16x16xf32, #tpu.memory_space<vmem>>, vector<1x1x16x16xf32>
    %28 = vector.shape_cast %27 : vector<1x1x16x16xf32> to vector<16x16xf32>
    %29 = vector.shape_cast %26 : vector<16x16xf32> to vector<1x1x16x16xf32>
    tpu.vector_store %arg5[%c0_32, %c2_33, %c0_34, %c0_35], %29 {strides = array<i32>} : memref<1x4x16x16xf32, #tpu.memory_space<vmem>>, vector<1x1x16x16xf32>,
    %c0_36 = arith.constant 0 : index
    %c0_37 = arith.constant 0 : index
    %30 = vector.load %arg3[%c0_36, %c0_37] : memref<16x8xf32, #tpu.memory_space<vmem>>, vector<16x8xf32>
    %c3 = arith.constant 3 : index
    %c0_38 = arith.constant 0 : index
    %c0_39 = arith.constant 0 : index
    %31 = vector.load %arg6[%c3, %c0_38, %c0_39] : memref<4x8x8xf32, #tpu.memory_space<vmem>>, vector<1x8x8xf32>
    %32 = vector.shape_cast %31 : vector<1x8x8xf32> to vector<8x8xf32>
    %cst_40 = arith.constant dense<0.000000e+00> : vector<16x8xf32>
    %33 = tpu.matmul %30, %32, %cst_40 {dimension_numbers = #tpu.dot_dimension_numbers<[1], [0], [0], [1], [0, 0, 1, 1], [], []>} : vector<16x8xf32>, vector<8x8xf32>, vector<16x8xf32> -> vector<16x8xf32>
    %c0_41 = arith.constant 0 : index
    %c0_42 = arith.constant 0 : index
    %34 = vector.load %arg4[%c0_41, %c0_42] : memref<8x16xf32, #tpu.memory_space<vmem>>, vector<8x16xf32>
    %cst_43 = arith.constant dense<0.000000e+00> : vector<16x16xf32>
    %35 = tpu.matmul %33, %34, %cst_43 {dimension_numbers = #tpu.dot_dimension_numbers<[1], [0], [0], [1], [0, 0, 1, 1], [], []>} : vector<16x8xf32>, vector<8x16xf32>, vector<16x16xf32> -> vector<16x16xf32>
    %c0_44 = arith.constant 0 : index
    %c3_45 = arith.constant 3 : index
    %c0_46 = arith.constant 0 : index
    %c0_47 = arith.constant 0 : index
    %36 = vector.load %arg5[%c0_44, %c3_45, %c0_46, %c0_47] : memref<1x4x16x16xf32, #tpu.memory_space<vmem>>, vector<1x1x16x16xf32>
    %37 = vector.shape_cast %36 : vector<1x1x16x16xf32> to vector<16x16xf32>
    %38 = vector.shape_cast %35 : vector<16x16xf32> to vector<1x1x16x16xf32>
    tpu.vector_store %arg5[%c0_44, %c3_45, %c0_46, %c0_47], %38 {strides = array<i32>} : memref<1x4x16x16xf32, #tpu.memory_space<vmem>>, vector<1x1x16x16xf32>,
    return
  }
  func.func @transform_0(%arg0: i32, %arg1: i32) -> (i32, i32, i32, i32) {
    %c0_i32 = arith.constant 0 : i32
    %c0_i32_0 = arith.constant 0 : i32
    %c0_i32_1 = arith.constant 0 : i32
    %c0_i32_2 = arith.constant 0 : i32
    return %arg0, %c0_i32, %c0_i32_0, %c0_i32_1 : i32, i32, i32, i32
  }
  func.func @transform_1(%arg0: i32, %arg1: i32) -> (i32, i32) {
    %c0_i32 = arith.constant 0 : i32
    %c0_i32_0 = arith.constant 0 : i32
    return %arg1, %c0_i32 : i32, i32
  }
  func.func @transform_2(%arg0: i32, %arg1: i32) -> (i32, i32) {
    %c0_i32 = arith.constant 0 : i32
    %c0_i32_0 = arith.constant 0 : i32
    %c0_i32_1 = arith.constant 0 : i32
    return %c0_i32, %c0_i32_0 : i32, i32
  }
  func.func @transform_3(%arg0: i32, %arg1: i32) -> (i32, i32, i32, i32) {
    %c0_i32 = arith.constant 0 : i32
    %c0_i32_0 = arith.constant 0 : i32
    %c0_i32_1 = arith.constant 0 : i32
    return %arg0, %c0_i32, %arg1, %c0_i32_0 : i32, i32, i32, i32
  }
}

</mosaic_0001>

<llo_original>
// kernel: tpu_custom_call.1
$region0: #{tpu_custom_call.1}
  #allocation0 [shape = 'u32[]', space=smem, size = 0x4, offset = 0x4, fixed_abs, tag = 'smem constant byte address 0x4 - core index']
  #allocation1 [shape = 'u32[72,128]{1,0:T(1,128)}', space=vmem, size = 0x9000, scoped, tag = 'internal scratch']
  #allocation2 [shape = 'f32[4,8,8]{2,1,0:T(8,128)}', space=vmem, size = 0x4000, scoped, tag = 'scratch operand']
  %s0 = inlined_call_operand.hbm [shape: f32[2,4,8,8], index: 0, kind: input, shape index: {}]
  %s1 = inlined_call_operand.vmem [shape: f32[16,8], index: 1, kind: input, shape index: {}]
  %s2 = inlined_call_operand.vmem [shape: f32[8,16], index: 2, kind: input, shape index: {}]
  %s3 = inlined_call_operand.hbm [shape: f32[2,4,16,16], index: 3, kind: output, shape index: {}]
  %s4 = sld [smem:[#allocation0]]
  $region53: #{tpu_custom_call.1} parent=0
    _
  %s6 = ssub.s32 1, %s4
  %s7 = scalar_select 0, %s6, %s4
  $region1: #{tpu_custom_call.1} parent=0
    #allocation3 [shape = 'u8[32768]{0}', space=vmem, size = 0x8000, scoped, tag = 'input window, operand 0']
    #allocation4 [shape = 's32[2]{0}', space=sflag, size = 0x8, scoped, tag = 'scoped memory for tpu_custom_call.1']
    #allocation5 [shape = 's32[2]{0}', space=sflag, size = 0x8, scoped, tag = 'scoped memory for tpu_custom_call.1']
    #allocation6 [shape = 'u8[65536]{0}', space=vmem, size = 0x10000, scoped, tag = 'output window, operand 0']
    %8 = vsyncpa [#allocation4], 0
    %s9 = scalar_lea.sflag [#allocation4], 1
    %10 = vsyncpa %s9, 0
    %11 = vsyncpa [#allocation5], 0
    %s12 = scalar_lea.sflag [#allocation5], 1
    %13 = vsyncpa %s12, 0
    loop: start=0, step=1, limit=4
    $region2: #{tpu_custom_call.1} parent=1 // loop_pre_header
      _
    $region3: #{tpu_custom_call.1} parent=1 // loop_header
      %s15 = sphi 0, %s19
      %p16 = scmp.ge.s32.totalorder %s15, 4
      %s22 = sphi 0, %s34
      %s23 = sphi 0, %s30
      %s24 = sphi 0, %s22
      %s25 = sphi 0, %s23
      %s26 = sphi 0, %s24
      %s27 = sphi 0, %s25
      %s37 = sphi 0, %s39
      %s40 = sphi 0, %s37
      %s41 = sphi 0, %s40
      %s57 = sphi 0, %s41
      %s63 = sphi 0, %s65
      %s66 = sphi 0, %s63
      %s67 = sphi 0, %s66
      %s83 = sphi 0, %s67
      %s87 = sphi 0, %s87
      %s89 = sphi 0, %s87
      %s90 = sphi 0, %s89
      %s104 = sphi 0, %s90
      %s112 = sphi 0, %s114
      %s115 = sphi 0, %s112
      %s116 = sphi 0, %s115
      %s132 = sphi 0, %s116
    $region4: #{tpu_custom_call.1} parent=1 // loop_header_branch
      %18 = sbr.rel (%p16) target = $region8
    $region5: #{tpu_custom_call.1} parent=1 // loop_body
      %s20 = ssub.s32 %s15, 1
      %s21 = ssub.s32 %s15, 2
      %s28 = sadd.s32 1, %s23
      %p29 = scmp.ge.s32.totalorder %s28, 1
      %s30 = scalar_select %p29, 0, %s28
      %s31 = sadd.s32 1, %s22
      %s32 = scalar_select %p29, %s31, %s22
      %p33 = scmp.ge.s32.totalorder %s32, 2
      %s34 = scalar_select %p33, 0, %s32
      %s35 = ssub.s32 %s22, %s34
      %p36 = scmp.eq.s32.totalorder %s35, 0
      %s38 = sadd.s32 %s37, 1
      %s39 = scalar_select %p36, %s37, %s38
      %p42 = pneg %p36
      %p43 = scmp.eq.s32.totalorder %s15, 1
      %p44 = por %p42, %p43
      %p45 = scmp.ne.s32.totalorder %s37, %s40
      %p46 = scmp.eq.s32.totalorder %s15, 0
      %p47 = por %p45, %p46
      %p48 = scmp.ne.s32.totalorder %s37, %s40
      %p49 = scmp.eq.s32.totalorder %s20, 1
      %p50 = por %p48, %p49
      %p51 = scmp.ne.s32.totalorder %s40, %s41
      %p52 = scmp.eq.s32.totalorder %s20, 0
      %p53 = por %p51, %p52
      %p54 = scmp.ne.s32.totalorder %s40, %s41
      %p55 = scmp.eq.s32.totalorder %s21, 1
      %p56 = por %p54, %p55
      %p58 = scmp.ne.s32.totalorder %s41, %s57
      %p59 = scmp.eq.s32.totalorder %s21, 0
      %p60 = por %p58, %p59
      %s61 = ssub.s32 %s23, %s30
      %p62 = scmp.eq.s32.totalorder %s61, 0
      %s64 = sadd.s32 %s63, 1
      %s65 = scalar_select %p62, %s63, %s64
      %p68 = pneg %p62
      %p69 = scmp.eq.s32.totalorder %s15, 1
      %p70 = por %p68, %p69
      %p71 = scmp.ne.s32.totalorder %s63, %s66
      %p72 = scmp.eq.s32.totalorder %s15, 0
      %p73 = por %p71, %p72
      %p74 = scmp.ne.s32.totalorder %s63, %s66
      %p75 = scmp.eq.s32.totalorder %s20, 1
      %p76 = por %p74, %p75
      %p77 = scmp.ne.s32.totalorder %s66, %s67
      %p78 = scmp.eq.s32.totalorder %s20, 0
      %p79 = por %p77, %p78
      %p80 = scmp.ne.s32.totalorder %s66, %s67
      %p81 = scmp.eq.s32.totalorder %s21, 1
      %p82 = por %p80, %p81
      %p84 = scmp.ne.s32.totalorder %s67, %s83
      %p85 = scmp.eq.s32.totalorder %s21, 0
      %p86 = por %p84, %p85
      %s88 = sadd.s32 %s87, 1
      %p91 = scmp.eq.s32.totalorder %s15, 1
      %p92 = scmp.ne.s32.totalorder %s87, %s89
      %p93 = scmp.eq.s32.totalorder %s15, 0
      %p94 = por %p92, %p93
      %p95 = scmp.ne.s32.totalorder %s87, %s89
      %p96 = scmp.eq.s32.totalorder %s20, 1
      %p97 = por %p95, %p96
      %p98 = scmp.ne.s32.totalorder %s89, %s90
      %p99 = scmp.eq.s32.totalorder %s20, 0
      %p100 = por %p98, %p99
      %p101 = scmp.ne.s32.totalorder %s89, %s90
      %p102 = scmp.eq.s32.totalorder %s21, 1
      %p103 = por %p101, %p102
      %p105 = scmp.ne.s32.totalorder %s90, %s104
      %p106 = scmp.eq.s32.totalorder %s21, 0
      %p107 = por %p105, %p106
      %s108 = ssub.s32 %s22, %s34
      %s109 = ssub.s32 %s23, %s30
      %s110 = sor.u32 %s108, %s109
      %p111 = scmp.eq.s32.totalorder %s110, 0
      %s113 = sadd.s32 %s112, 1
      %s114 = scalar_select %p111, %s112, %s113
      %p117 = pneg %p111
      %p118 = scmp.eq.s32.totalorder %s15, 1
      %p119 = por %p117, %p118
      %p120 = scmp.ne.s32.totalorder %s112, %s115
      %p121 = scmp.eq.s32.totalorder %s15, 0
      %p122 = por %p120, %p121
      %p123 = scmp.ne.s32.totalorder %s112, %s115
      %p124 = scmp.eq.s32.totalorder %s20, 1
      %p125 = por %p123, %p124
      %p126 = scmp.ne.s32.totalorder %s115, %s116
      %p127 = scmp.eq.s32.totalorder %s20, 0
      %p128 = por %p126, %p127
      %p129 = scmp.ne.s32.totalorder %s115, %s116
      %p130 = scmp.eq.s32.totalorder %s21, 1
      %p131 = por %p129, %p130
      %p133 = scmp.ne.s32.totalorder %s116, %s132
      %p134 = scmp.eq.s32.totalorder %s21, 0
      %p135 = por %p133, %p134
      %p136 = scmp.le.s32.totalorder 1, %s15
      %p137 = scmp.lt.s32.totalorder %s15, 3
      %p138 = pnand %p136, %p137
      %p139 = pneg %p138
      // Predicated region
      $region9: #{tpu_custom_call.1} parent=5 // pred_check
        _
      $region10: #{tpu_custom_call.1} parent=5 // pred_check_branch
        %141 = sbr.rel (%p138) target = $region12
      $region11: #{tpu_custom_call.1} parent=5 // pred_region
        %s142 = ssub.s32 %s15, 1
        // Predicated region
        $region13: #{tpu_custom_call.1} parent=11 // pred_check
          %p143 = pneg %p79
        $region14: #{tpu_custom_call.1} parent=11 // pred_check_branch
          %145 = sbr.rel (%p143) target = $region16
        $region15: #{tpu_custom_call.1} parent=11 // pred_region
          %s146 = smul.u32 2, %s25
          %p147 = scmp.lt.s32.totalorder %s146, 1
          %s148 = scalar_select %p147, %s146, 1
          %s149 = smul.addr %s148, 8
          %s150 = scalar_lea.vmem %s1, %s149
          %s151 = smul.u32 2, %s25
        $region16: #{tpu_custom_call.1} parent=11 // pred_fallthru
          _
        // Predicated region
        $region17: #{tpu_custom_call.1} parent=11 // pred_check
          %p152 = pneg %p100
        $region18: #{tpu_custom_call.1} parent=11 // pred_check_branch
          %154 = sbr.rel (%p152) target = $region20
        $region19: #{tpu_custom_call.1} parent=11 // pred_region
          _
        $region20: #{tpu_custom_call.1} parent=11 // pred_fallthru
          _
      $region12: #{tpu_custom_call.1} parent=5 // pred_fallthru
        _
      %p155 = scmp.lt.s32.totalorder %s15, 2
      // Predicated region
      $region21: #{tpu_custom_call.1} parent=5 // pred_check
        %p156 = pneg %p155
      $region22: #{tpu_custom_call.1} parent=5 // pred_check_branch
        %158 = sbr.rel (%p156) target = $region24
      $region23: #{tpu_custom_call.1} parent=5 // pred_region
        // Predicated region
        $region25: #{tpu_custom_call.1} parent=23 // pred_check
          %p159 = pneg %p47
        $region26: #{tpu_custom_call.1} parent=23 // pred_check_branch
          %161 = sbr.rel (%p159) target = $region28
        $region27: #{tpu_custom_call.1} parent=23 // pred_region
          %s162 = sand.u32 %s37, 1
          %s163 = scalar_lea.sflag [#allocation4], %s162
          %s164 = sand.u32 %s37, 1
          %s165 = smul.addr %s164, 32
          %s166 = scalar_lea.vmem [#allocation3], %s165
          %168 = vsyncadd %s163, 0
          %s169 = smul.addr %s22, 4
          %s170 = smul.addr %s169, 8
          %s171 = scalar_lea.hbm %s0, %s170
          %s172 = sshll.u32 %s171, 4
          %s173 = int_to_ptr.hbm [resolvable:$true] %s172
          %s174 = sshll.u32 %s166, 4
          %s175 = int_to_ptr.vmem [resolvable:$true] %s174
          %180 = dma.hbm_to_vmem [thread:$0]  %s173, 512, %s175, %s163, 128, 128, 8
        $region28: #{tpu_custom_call.1} parent=23 // pred_fallthru
          _
      $region24: #{tpu_custom_call.1} parent=5 // pred_fallthru
        _
      %p181 = scmp.le.s32.totalorder 1, %s15
      %p182 = scmp.lt.s32.totalorder %s15, 3
      %p183 = pnand %p181, %p182
      %p184 = pneg %p183
      // Predicated region
      $region29: #{tpu_custom_call.1} parent=5 // pred_check
        _
      $region30: #{tpu_custom_call.1} parent=5 // pred_check_branch
        %186 = sbr.rel (%p183) target = $region32
      $region31: #{tpu_custom_call.1} parent=5 // pred_region
        %s187 = ssub.s32 %s15, 1
        %s188 = sand.u32 %s40, 1
        %s189 = scalar_lea.sflag [#allocation4], %s188
        %s190 = sand.u32 %s40, 1
        %s191 = smul.addr %s190, 32
        %s192 = scalar_lea.vmem [#allocation3], %s191
        // Predicated region
        $region33: #{tpu_custom_call.1} parent=31 // pred_check
          %p193 = pneg %p53
        $region34: #{tpu_custom_call.1} parent=31 // pred_check_branch
          %195 = sbr.rel (%p193) target = $region36
        $region35: #{tpu_custom_call.1} parent=31 // pred_region
          %197 = dma.done %s189, 512
        $region36: #{tpu_custom_call.1} parent=31 // pred_fallthru
          _
        %s198 = sand.u32 %s40, 1
        %s199 = scalar_lea.sflag [#allocation4], %s198
        %s200 = sand.u32 %s40, 1
        %s201 = smul.addr %s200, 32
        %s202 = scalar_lea.vmem [#allocation3], %s201
        %p203 = pneg %p53
        %p204 = pneg %p50
        %s205 = smul.u32 2, %s25
        %p206 = scmp.lt.s32.totalorder %s205, 1
        %s207 = scalar_select %p206, %s205, 1
        %s208 = smul.addr %s207, 8
        %s209 = scalar_lea.vmem %s1, %s208
        %p210 = pneg %p79
        %p211 = pneg %p76
        %p212 = pneg %p100
        %p213 = pneg %p97
        %p214 = pneg %p128
        %p215 = pneg %p125
        %s216 = sand.u32 %s115, 1
        %s217 = scalar_lea.sflag [#allocation5], %s216
        %s218 = sand.u32 %s115, 1
        %s219 = smul.addr %s218, 64
        %s220 = scalar_lea.vmem [#allocation6], %s219
        %s221 = smul.u32 2, %s25
        %p222 = scmp.lt.s32.totalorder %s221, 1
        %s223 = scalar_select %p222, %s221, 1
        %s224 = smul.addr %s223, 8
        %s225 = scalar_lea.vmem %s1, %s224
        %s226 = smul.u32 2, %s25
        %s227 = smul.u32 2, %s25
        %p228 = scmp.eq.s32.totalorder %s25, 0
        // Predicated region
        $region37: #{tpu_custom_call.1} parent=31 // pred_check
          %p229 = pneg %p228
        $region38: #{tpu_custom_call.1} parent=31 // pred_check_branch
          %231 = sbr.rel (%p229) target = $region40
        $region39: #{tpu_custom_call.1} parent=31 // pred_region
          %v232 = vld [vmem:[%s192] sm:$0xff]
          %v233 = vmul.f32 %v232, 0.5247131
          %s234 = scalar_lea.vmem %s192, 8 [#allocation3]
          %v235 = vld [vmem:[%s234] sm:$0xff]
          %v236 = vmul.f32 %v235, 0.16152072
          %v237 = vadd.f32 %v233, %v236
          %s238 = scalar_lea.vmem %s192, 16 [#allocation3]
          %v239 = vld [vmem:[%s238] sm:$0xff]
          %v240 = vmul.f32 %v239, 0.18617588
          %v241 = vadd.f32 %v237, %v240
          %s242 = scalar_lea.vmem %s192, 24 [#allocation3]
          %v243 = vld [vmem:[%s242] sm:$0xff]
          %v244 = vmul.f32 %v243, 0.12759027
          %v245 = vadd.f32 %v241, %v244
          %vm246 = vcmask 64512
          %247 = vst.msk [vmem:[#allocation2] sm:$0xff] %vm246, %v245
          %v248 = vld [vmem:[%s192] sm:$0xff]
          %v249 = vmul.f32 %v248, 0.13308002
          %v250 = vld [vmem:[%s234] sm:$0xff]
          %v251 = vmul.f32 %v250, 0.36600673
          %v252 = vadd.f32 %v249, %v251
          %v253 = vld [vmem:[%s238] sm:$0xff]
          %v254 = vmul.f32 %v253, 0.38508654
          %v255 = vadd.f32 %v252, %v254
          %v256 = vld [vmem:[%s242] sm:$0xff]
          %v257 = vmul.f32 %v256, 0.115826696
          %v258 = vadd.f32 %v255, %v257
          %s259 = scalar_lea.vmem [#allocation2], 8
          %260 = vst.msk [vmem:[%s259] sm:$0xff] %vm246, %v258
          %v261 = vld [vmem:[%s192] sm:$0xff]
          %v262 = vmul.f32 %v261, 0.51163036
          %v263 = vld [vmem:[%s234] sm:$0xff]
          %v264 = vmul.f32 %v263, 0.067597635
          %v265 = vadd.f32 %v262, %v264
          %v266 = vld [vmem:[%s238] sm:$0xff]
          %v267 = vmul.f32 %v266, 0.10100618
          %v268 = vadd.f32 %v265, %v267
          %v269 = vld [vmem:[%s242] sm:$0xff]
          %v270 = vmul.f32 %v269, 0.31976587
          %v271 = vadd.f32 %v268, %v270
          %s272 = scalar_lea.vmem [#allocation2], 16
          %273 = vst.msk [vmem:[%s272] sm:$0xff] %vm246, %v271
          %v274 = vld [vmem:[%s192] sm:$0xff]
          %v275 = vmul.f32 %v274, 0.083644845
          %v276 = vld [vmem:[%s234] sm:$0xff]
          %v277 = vmul.f32 %v276, 0.2505789
          %v278 = vadd.f32 %v275, %v277
          %v279 = vld [vmem:[%s238] sm:$0xff]
          %v280 = vmul.f32 %v279, 0.38016218
          %v281 = vadd.f32 %v278, %v280
          %v282 = vld [vmem:[%s242] sm:$0xff]
          %v283 = vmul.f32 %v282, 0.2856141
          %v284 = vadd.f32 %v281, %v283
          %s285 = scalar_lea.vmem [#allocation2], 24
          %286 = vst.msk [vmem:[%s285] sm:$0xff] %vm246, %v284
        $region40: #{tpu_custom_call.1} parent=31 // pred_fallthru
          _
        %v287 = vld [vmem:[%s225] sm:$0xff]
        %v288 = vld [vmem:[%s225 + $0x8] sm:$0xff]
        %v289 = vld [vmem:[#allocation2] sm:$0xff]
        %vm290 = vcmask 64512
        %v292 = vsel %vm290, %v287, 0
        %v295 = vsel %vm290, %v288, 0
        %297 = vmatpush.msra.mxu0 0.0
        %298 = vmatpush.msra.mxu0 0.0
        %299 = vmatpush.msra.mxu0 0.0
        %300 = vmatpush.msra.mxu0 0.0
        %301 = vmatpush.msra.mxu0 0.0
        %302 = vmatpush.msra.mxu0 0.0
        %303 = vmatpush.msra.mxu0 0.0
        %304 = vmatpush.msra.mxu0 0.0
        %305 = vmatpush.msra.mxu0 0.0
        %306 = vmatpush.msra.mxu0 0.0
        %307 = vmatpush.msra.mxu0 0.0
        %308 = vmatpush.msra.mxu0 0.0
        %309 = vmatpush.msra.mxu0 0.0
        %310 = vmatpush.msra.mxu0 0.0
        %311 = vmatpush.msra.mxu0 0.0
        %312 = vmatpush.msra.mxu0 %v289
        %313 = vmatmul.f32.gmra.mxu0 %v292
        %v314 = vpop.f32.mrf.mxu0
        %v315 = vadd.f32 0.0, %v314
        %316 = vmatmul.f32.gmra.mxu0 %v295
        %v317 = vpop.f32.mrf.mxu0
        %v318 = vadd.f32 0.0, %v317
        %319 = vdwg.mxu0
        %v320 = vld [vmem:[%s2] sm:$0xff]
        %v322 = vsel %vm290, %v315, 0
        %v325 = vsel %vm290, %v318, 0
        %327 = vmatpush.msra.mxu0 0.0
        %328 = vmatpush.msra.mxu0 0.0
        %329 = vmatpush.msra.mxu0 0.0
        %330 = vmatpush.msra.mxu0 0.0
        %331 = vmatpush.msra.mxu0 0.0
        %332 = vmatpush.msra.mxu0 0.0
        %333 = vmatpush.msra.mxu0 0.0
        %334 = vmatpush.msra.mxu0 0.0
        %335 = vmatpush.msra.mxu0 0.0
        %336 = vmatpush.msra.mxu0 0.0
        %337 = vmatpush.msra.mxu0 0.0
        %338 = vmatpush.msra.mxu0 0.0
        %339 = vmatpush.msra.mxu0 0.0
        %340 = vmatpush.msra.mxu0 0.0
        %341 = vmatpush.msra.mxu0 0.0
        %342 = vmatpush.msra.mxu0 %v320
        %343 = vmatmul.f32.gmra.mxu0 %v322
        %v344 = vpop.f32.mrf.mxu0
        %v345 = vadd.f32 0.0, %v344
        %346 = vmatmul.f32.gmra.mxu0 %v325
        %v347 = vpop.f32.mrf.mxu0
        %v348 = vadd.f32 0.0, %v347
        %349 = vdwg.mxu0
        %vm350 = vcmask 130048
        %351 = vst.msk [vmem:[%s220] sm:$0xff] %vm350, %v345
        %352 = vst.msk [vmem:[%s220 + $0x8] sm:$0xff] %vm350, %v348
        %v353 = vld [vmem:[%s225] sm:$0xff]
        %v354 = vld [vmem:[%s225 + $0x8] sm:$0xff]
        %s355 = scalar_lea.vmem [#allocation2], 8
        %v356 = vld [vmem:[%s355] sm:$0xff]
        %v358 = vsel %vm290, %v353, 0
        %v361 = vsel %vm290, %v354, 0
        %363 = vmatpush.msra.mxu0 0.0
        %364 = vmatpush.msra.mxu0 0.0
        %365 = vmatpush.msra.mxu0 0.0
        %366 = vmatpush.msra.mxu0 0.0
        %367 = vmatpush.msra.mxu0 0.0
        %368 = vmatpush.msra.mxu0 0.0
        %369 = vmatpush.msra.mxu0 0.0
        %370 = vmatpush.msra.mxu0 0.0
        %371 = vmatpush.msra.mxu0 0.0
        %372 = vmatpush.msra.mxu0 0.0
        %373 = vmatpush.msra.mxu0 0.0
        %374 = vmatpush.msra.mxu0 0.0
        %375 = vmatpush.msra.mxu0 0.0
        %376 = vmatpush.msra.mxu0 0.0
        %377 = vmatpush.msra.mxu0 0.0
        %378 = vmatpush.msra.mxu0 %v356
        %379 = vmatmul.f32.gmra.mxu0 %v358
        %v380 = vpop.f32.mrf.mxu0
        %v381 = vadd.f32 0.0, %v380
        %382 = vmatmul.f32.gmra.mxu0 %v361
        %v383 = vpop.f32.mrf.mxu0
        %v384 = vadd.f32 0.0, %v383
        %385 = vdwg.mxu0
        %v386 = vld [vmem:[%s2] sm:$0xff]
        %v388 = vsel %vm290, %v381, 0
        %v391 = vsel %vm290, %v384, 0
        %393 = vmatpush.msra.mxu0 0.0
        %394 = vmatpush.msra.mxu0 0.0
        %395 = vmatpush.msra.mxu0 0.0
        %396 = vmatpush.msra.mxu0 0.0
        %397 = vmatpush.msra.mxu0 0.0
        %398 = vmatpush.msra.mxu0 0.0
        %399 = vmatpush.msra.mxu0 0.0
        %400 = vmatpush.msra.mxu0 0.0
        %401 = vmatpush.msra.mxu0 0.0
        %402 = vmatpush.msra.mxu0 0.0
        %403 = vmatpush.msra.mxu0 0.0
        %404 = vmatpush.msra.mxu0 0.0
        %405 = vmatpush.msra.mxu0 0.0
        %406 = vmatpush.msra.mxu0 0.0
        %407 = vmatpush.msra.mxu0 0.0
        %408 = vmatpush.msra.mxu0 %v386
        %409 = vmatmul.f32.gmra.mxu0 %v388
        %v410 = vpop.f32.mrf.mxu0
        %v411 = vadd.f32 0.0, %v410
        %412 = vmatmul.f32.gmra.mxu0 %v391
        %v413 = vpop.f32.mrf.mxu0
        %v414 = vadd.f32 0.0, %v413
        %415 = vdwg.mxu0
        %s416 = scalar_lea.vmem %s220, 16 [#allocation6]
        %417 = vst.msk [vmem:[%s416] sm:$0xff] %vm350, %v411
        %418 = vst.msk [vmem:[%s416 + $0x8] sm:$0xff] %vm350, %v414
        %v419 = vld [vmem:[%s225] sm:$0xff]
        %v420 = vld [vmem:[%s225 + $0x8] sm:$0xff]
        %s421 = scalar_lea.vmem [#allocation2], 16
        %v422 = vld [vmem:[%s421] sm:$0xff]
        %v424 = vsel %vm290, %v419, 0
        %v427 = vsel %vm290, %v420, 0
        %429 = vmatpush.msra.mxu0 0.0
        %430 = vmatpush.msra.mxu0 0.0
        %431 = vmatpush.msra.mxu0 0.0
        %432 = vmatpush.msra.mxu0 0.0
        %433 = vmatpush.msra.mxu0 0.0
        %434 = vmatpush.msra.mxu0 0.0
        %435 = vmatpush.msra.mxu0 0.0
        %436 = vmatpush.msra.mxu0 0.0
        %437 = vmatpush.msra.mxu0 0.0
        %438 = vmatpush.msra.mxu0 0.0
        %439 = vmatpush.msra.mxu0 0.0
        %440 = vmatpush.msra.mxu0 0.0
        %441 = vmatpush.msra.mxu0 0.0
        %442 = vmatpush.msra.mxu0 0.0
        %443 = vmatpush.msra.mxu0 0.0
        %444 = vmatpush.msra.mxu0 %v422
        %445 = vmatmul.f32.gmra.mxu0 %v424
        %v446 = vpop.f32.mrf.mxu0
        %v447 = vadd.f32 0.0, %v446
        %448 = vmatmul.f32.gmra.mxu0 %v427
        %v449 = vpop.f32.mrf.mxu0
        %v450 = vadd.f32 0.0, %v449
        %451 = vdwg.mxu0
        %v452 = vld [vmem:[%s2] sm:$0xff]
        %v454 = vsel %vm290, %v447, 0
        %v457 = vsel %vm290, %v450, 0
        %459 = vmatpush.msra.mxu0 0.0
        %460 = vmatpush.msra.mxu0 0.0
        %461 = vmatpush.msra.mxu0 0.0
        %462 = vmatpush.msra.mxu0 0.0
        %463 = vmatpush.msra.mxu0 0.0
        %464 = vmatpush.msra.mxu0 0.0
        %465 = vmatpush.msra.mxu0 0.0
        %466 = vmatpush.msra.mxu0 0.0
        %467 = vmatpush.msra.mxu0 0.0
        %468 = vmatpush.msra.mxu0 0.0
        %469 = vmatpush.msra.mxu0 0.0
        %470 = vmatpush.msra.mxu0 0.0
        %471 = vmatpush.msra.mxu0 0.0
        %472 = vmatpush.msra.mxu0 0.0
        %473 = vmatpush.msra.mxu0 0.0
        %474 = vmatpush.msra.mxu0 %v452
        %475 = vmatmul.f32.gmra.mxu0 %v454
        %v476 = vpop.f32.mrf.mxu0
        %v477 = vadd.f32 0.0, %v476
        %478 = vmatmul.f32.gmra.mxu0 %v457
        %v479 = vpop.f32.mrf.mxu0
        %v480 = vadd.f32 0.0, %v479
        %481 = vdwg.mxu0
        %s482 = scalar_lea.vmem %s220, 32 [#allocation6]
        %483 = vst.msk [vmem:[%s482] sm:$0xff] %vm350, %v477
        %484 = vst.msk [vmem:[%s482 + $0x8] sm:$0xff] %vm350, %v480
        %v485 = vld [vmem:[%s225] sm:$0xff]
        %v486 = vld [vmem:[%s225 + $0x8] sm:$0xff]
        %s487 = scalar_lea.vmem [#allocation2], 24
        %v488 = vld [vmem:[%s487] sm:$0xff]
        %v490 = vsel %vm290, %v485, 0
        %v493 = vsel %vm290, %v486, 0
        %495 = vmatpush.msra.mxu0 0.0
        %496 = vmatpush.msra.mxu0 0.0
        %497 = vmatpush.msra.mxu0 0.0
        %498 = vmatpush.msra.mxu0 0.0
        %499 = vmatpush.msra.mxu0 0.0
        %500 = vmatpush.msra.mxu0 0.0
        %501 = vmatpush.msra.mxu0 0.0
        %502 = vmatpush.msra.mxu0 0.0
        %503 = vmatpush.msra.mxu0 0.0
        %504 = vmatpush.msra.mxu0 0.0
        %505 = vmatpush.msra.mxu0 0.0
        %506 = vmatpush.msra.mxu0 0.0
        %507 = vmatpush.msra.mxu0 0.0
        %508 = vmatpush.msra.mxu0 0.0
        %509 = vmatpush.msra.mxu0 0.0
        %510 = vmatpush.msra.mxu0 %v488
        %511 = vmatmul.f32.gmra.mxu0 %v490
        %v512 = vpop.f32.mrf.mxu0
        %v513 = vadd.f32 0.0, %v512
        %514 = vmatmul.f32.gmra.mxu0 %v493
        %v515 = vpop.f32.mrf.mxu0
        %v516 = vadd.f32 0.0, %v515
        %517 = vdwg.mxu0
        %v518 = vld [vmem:[%s2] sm:$0xff]
        %v520 = vsel %vm290, %v513, 0
        %v523 = vsel %vm290, %v516, 0
        %525 = vmatpush.msra.mxu0 0.0
        %526 = vmatpush.msra.mxu0 0.0
        %527 = vmatpush.msra.mxu0 0.0
        %528 = vmatpush.msra.mxu0 0.0
        %529 = vmatpush.msra.mxu0 0.0
        %530 = vmatpush.msra.mxu0 0.0
        %531 = vmatpush.msra.mxu0 0.0
        %532 = vmatpush.msra.mxu0 0.0
        %533 = vmatpush.msra.mxu0 0.0
        %534 = vmatpush.msra.mxu0 0.0
        %535 = vmatpush.msra.mxu0 0.0
        %536 = vmatpush.msra.mxu0 0.0
        %537 = vmatpush.msra.mxu0 0.0
        %538 = vmatpush.msra.mxu0 0.0
        %539 = vmatpush.msra.mxu0 0.0
        %540 = vmatpush.msra.mxu0 %v518
        %541 = vmatmul.f32.gmra.mxu0 %v520
        %v542 = vpop.f32.mrf.mxu0
        %v543 = vadd.f32 0.0, %v542
        %544 = vmatmul.f32.gmra.mxu0 %v523
        %v545 = vpop.f32.mrf.mxu0
        %v546 = vadd.f32 0.0, %v545
        %547 = vdwg.mxu0
        %s548 = scalar_lea.vmem %s220, 48 [#allocation6]
        %549 = vst.msk [vmem:[%s548] sm:$0xff] %vm350, %v543
        %550 = vst.msk [vmem:[%s548 + $0x8] sm:$0xff] %vm350, %v546
        %s551 = sand.u32 %s115, 1
        %s552 = scalar_lea.sflag [#allocation5], %s551
        %s553 = sand.u32 %s115, 1
        %s554 = smul.addr %s553, 64
        %s555 = scalar_lea.vmem [#allocation6], %s554
        // Predicated region
        $region41: #{tpu_custom_call.1} parent=31 // pred_check
          %p556 = pneg %p125
        $region42: #{tpu_custom_call.1} parent=31 // pred_check_branch
          %558 = sbr.rel (%p556) target = $region44
        $region43: #{tpu_custom_call.1} parent=31 // pred_region
          %s559 = smul.u32 2, %s25
          %561 = vsyncadd %s552, 0
          %s562 = smul.addr %s24, 8
          %s563 = sadd.s32 %s559, %s562
          %s564 = smul.addr %s563, 8
          %s565 = scalar_lea.hbm %s3, %s564
          %s566 = sshll.u32 %s555, 4
          %s567 = int_to_ptr.vmem [resolvable:$true] %s566
          %s568 = sshll.u32 %s565, 4
          %s569 = int_to_ptr.hbm [resolvable:$true] %s568
          %574 = dma.vmem_to_hbm [thread:$0]  %s567, 1024, %s569, %s552, 128, 128, 8
        $region44: #{tpu_custom_call.1} parent=31 // pred_fallthru
          _
      $region32: #{tpu_custom_call.1} parent=5 // pred_fallthru
        _
      %p575 = scmp.le.s32.totalorder 2, %s15
      // Predicated region
      $region45: #{tpu_custom_call.1} parent=5 // pred_check
        %p576 = pneg %p575
      $region46: #{tpu_custom_call.1} parent=5 // pred_check_branch
        %578 = sbr.rel (%p576) target = $region48
      $region47: #{tpu_custom_call.1} parent=5 // pred_region
        %s579 = ssub.s32 %s15, 2
        // Predicated region
        $region49: #{tpu_custom_call.1} parent=47 // pred_check
          %p580 = pneg %p131
        $region50: #{tpu_custom_call.1} parent=47 // pred_check_branch
          %582 = sbr.rel (%p580) target = $region52
        $region51: #{tpu_custom_call.1} parent=47 // pred_region
          %s583 = sand.u32 %s116, 1
          %s584 = scalar_lea.sflag [#allocation5], %s583
          %s585 = sand.u32 %s116, 1
          %s586 = smul.addr %s585, 64
          %s587 = scalar_lea.vmem [#allocation6], %s586
          %589 = dma.done %s584, 1024
        $region52: #{tpu_custom_call.1} parent=47 // pred_fallthru
          _
      $region48: #{tpu_custom_call.1} parent=5 // pred_fallthru
        _
    $region6: #{tpu_custom_call.1} parent=1 // loop_footer
      %s19 = sadd.s32 1, %s15
    $region7: #{tpu_custom_call.1} parent=1 // loop_footer_branch
      %14 = sbr.rel target = $region3
    $region8: #{tpu_custom_call.1} parent=1 // loop_exit
      _
    %590 = vsyncpa [#allocation4], 1
    %s591 = scalar_lea.sflag [#allocation4], 1
    %592 = vsyncpa %s591, 1
    %593 = vsyncpa [#allocation5], 1
    %s594 = scalar_lea.sflag [#allocation5], 1
    %595 = vsyncpa %s594, 1

</llo_original>
